<compile_context>
chip_gen: v5e
topology: v5e:2x2
jax: 0.10.0
libtpu: 0.0.40
codegen_flags: <defaults>
</compile_context>

<pallas_src>
import functools

import jax
import jax.numpy as jnp
from jax.experimental import pallas as pl
from jax.experimental.pallas import tpu as pltpu


def _round_up(x: int, m: int) -> int:
    return (x + m - 1) // m * m


def _cdiv(a: int, b: int) -> int:
    return (a + b - 1) // b


def _qnet_kernel(x_ref, w1_ref, b1_ref, w2_ref, b2_ref, o_ref):
    # x:  [TB, d_in] f32   (cast to bf16 here; no separate HBM pre-pass)
    # w1: [d_in, Hp] bf16, b1: [1, Hp] f32
    # w2: [Hp, Op]   f32,  b2: [1, Op] f32   (layer 2 kept in f32 for parity)
    # o:  [TB, Op]   f32   (lane-dense 128-wide slab -> unmasked vst)
    x = x_ref[...].astype(jnp.bfloat16)
    h = jnp.dot(x, w1_ref[...], preferred_element_type=jnp.float32)
    h = jnp.maximum(h + b1_ref[...], 0.0)                     # bias + ReLU in f32
    out = jnp.dot(h, w2_ref[...], preferred_element_type=jnp.float32)
    o_ref[...] = out + b2_ref[...]


def _resident_spec(block_shape):
    """Constant-index_map (VMEM-resident) spec; single-buffered when supported."""
    idx = lambda i: (0, 0)
    buffered = getattr(pl, "Buffered", None)
    if buffered is not None:
        try:
            return pl.BlockSpec(block_shape, idx, pipeline_mode=buffered(1))
        except TypeError:   # older JAX without pipeline_mode on BlockSpec
            pass
    return pl.BlockSpec(block_shape, idx)


def _pick_batch_tile(B, d_in, hp, op, tb_max):
    """Batch tile: multiple of 16 (bf16 sublane packing), >=2 grid steps when B
    permits (so 'parallel' actually uses both v7x TensorCores), sized to fit the
    smallest default scoped-VMEM budget across v5e/v6e/v7x."""
    if B <= 16:
        return _round_up(max(B, 1), 8)
    tb = min(tb_max, _round_up(B, 16))
    if B >= 32:                                    # guarantee >=2 grid steps
        tb = min(tb, _round_up(_cdiv(B, 2), 16))
    # VMEM estimate: double-buffered x/out tiles + single-buffered weights/biases.
    weight_bytes = d_in * hp * 2 + hp * 4 + hp * op * 4 + op * 4
    budget = 12 * 1024 * 1024                      # under v5e 16 MiB scoped default
    tile_bytes = lambda t: weight_bytes + 2 * t * d_in * 4 + 2 * t * op * 4
    while tb > 16 and tile_bytes(tb) > budget:
        tb = _round_up(tb // 2, 16)
    return max(tb, 16)


@functools.partial(jax.jit, static_argnames=("tb_max", "slice_output"))
def qnetwork_forward(x, w1, b1, w2, b2, *, tb_max: int = 512, slice_output: bool = True):
    """QNetwork forward pass.

    x:  [B, ...] (flattened per example, like torch flatten)
    w1: [d_in, hidden], b1: [hidden]
    w2: [hidden, d_out], b2: [d_out]
    Returns [B, d_out] f32, or the padded lane-dense [B, Op] slab if
    slice_output=False so a downstream consumer can fuse/elide the column slice.
    """
    B = x.shape[0]
    xf = x.reshape(B, -1).astype(jnp.float32)      # flatten; fed straight to the kernel
    d_in = xf.shape[1]
    hidden = w1.shape[1]
    d_out = w2.shape[1]
    assert w1.shape == (d_in, hidden) and w2.shape == (hidden, d_out)

    # Lane-dense padding (zero pads contribute exactly zero to the results).
    # In a real training loop these padded params would be prepared once, not per call.
    hp = _round_up(hidden, 128)
    op = _round_up(d_out, 128)
    w1p = jnp.zeros((d_in, hp), jnp.bfloat16).at[:, :hidden].set(w1.astype(jnp.bfloat16))
    b1p = jnp.zeros((1, hp), jnp.float32).at[:, :hidden].set(b1.reshape(1, -1).astype(jnp.float32))
    w2p = jnp.zeros((hp, op), jnp.float32).at[:hidden, :d_out].set(w2.astype(jnp.float32))
    b2p = jnp.zeros((1, op), jnp.float32).at[:, :d_out].set(b2.reshape(1, -1).astype(jnp.float32))

    TB = _pick_batch_tile(B, d_in, hp, op, tb_max)
    grid = (_cdiv(B, TB),)     # partial final block handled by Pallas (no batch padding)

    cost = pl.CostEstimate(
        flops=2 * B * (d_in * hp + hp * op),
        transcendentals=0,
        bytes_accessed=(4 * B * d_in               # f32 activations in
                        + 4 * B * op               # f32 lane-dense output slab
                        + 2 * d_in * hp + 4 * hp * op   # weights
                        + 4 * (hp + op)),          # biases
    )

    out_pad = pl.pallas_call(
        _qnet_kernel,
        out_shape=jax.ShapeDtypeStruct((B, op), jnp.float32),
        grid_spec=pltpu.PrefetchScalarGridSpec(
            num_scalar_prefetch=0,
            grid=grid,
            in_specs=[
                pl.BlockSpec((TB, d_in), lambda i: (i, 0)),   # x tile marches over batch
                _resident_spec((d_in, hp)),                   # w1 resident, single-buffered
                _resident_spec((1, hp)),                      # b1
                _resident_spec((hp, op)),                     # w2
                _resident_spec((1, op)),                      # b2
            ],
            out_specs=pl.BlockSpec((TB, op), lambda i: (i, 0)),
        ),
        compiler_params=pltpu.CompilerParams(
            dimension_semantics=("parallel",),     # batch tiles shard across TCs on v7x
        ),
        cost_estimate=cost,
    )(xf, w1p, b1p, w2p, b2p)

    if slice_output:
        return out_pad[:, :d_out]
    return out_pad


def _init_params(key, input_dim, hidden, output_dim):
    # Deterministic synthetic init (PyTorch-style uniform bounds), stored as
    # [in, out] so the kernel computes x @ W + b.
    k1, k2, k3, k4 = jax.random.split(key, 4)
    bound1 = 1.0 / jnp.sqrt(input_dim)
    bound2 = 1.0 / jnp.sqrt(hidden)
    w1 = jax.random.uniform(k1, (input_dim, hidden), jnp.float32, -bound1, bound1)
    b1 = jax.random.uniform(k2, (hidden,), jnp.float32, -bound1, bound1)
    w2 = jax.random.uniform(k3, (hidden, output_dim), jnp.float32, -bound2, bound2)
    b2 = jax.random.uniform(k4, (output_dim,), jnp.float32, -bound2, bound2)
    return w1, b1, w2, b2


def _reference(x, w1, b1, w2, b2):
    # Mirrors the kernel numerics: bf16 x/w1 with f32 accumulation, f32 layer 2.
    B = x.shape[0]
    xf = x.reshape(B, -1)
    xr = xf.astype(jnp.bfloat16).astype(jnp.float32)
    w1r = w1.astype(jnp.bfloat16).astype(jnp.float32)
    h = jnp.maximum(xr @ w1r + b1[None, :], 0.0)
    return h @ w2 + b2[None, :]


if __name__ == "__main__":
    key = jax.random.PRNGKey(0)
    kx, kx2, kp = jax.random.split(key, 3)

    # Small shapes: batch=2, channels=4, spatial=4x2 -> input_dim = 32
    B, C, H, W = 2, 4, 4, 2
    input_dim, hidden, output_dim = C * H * W, 64, 8

    x = jax.random.normal(kx, (B, C, H, W), jnp.float32)
    w1, b1, w2, b2 = _init_params(kp, input_dim, hidden, output_dim)

    out = jax.block_until_ready(qnetwork_forward(x, w1, b1, w2, b2))
    assert out.shape == (B, output_dim)

    ref = _reference(x, w1, b1, w2, b2)
    assert jnp.allclose(out, ref, atol=2e-3, rtol=2e-3), (out, ref)

    # Loose sanity check against the pure-f32 math of the original torch module.
    xf = x.reshape(B, -1)
    ref_f32 = jnp.maximum(xf @ w1 + b1[None, :], 0.0) @ w2 + b2[None, :]
    assert jnp.allclose(out, ref_f32, atol=1e-1, rtol=1e-1)

    # Second case: batch not a multiple of the tile -> exercises a multi-step grid,
    # megacore-friendly tile split, and Pallas partial-final-block handling.
    B2 = 40
    x2 = jax.random.normal(kx2, (B2, C, H, W), jnp.float32)
    out2 = jax.block_until_ready(qnetwork_forward(x2, w1, b1, w2, b2))
    assert out2.shape == (B2, output_dim)
    ref2 = _reference(x2, w1, b1, w2, b2)
    assert jnp.allclose(out2, ref2, atol=2e-3, rtol=2e-3)

    print("KERNEL_OK")
</pallas_src>

<mosaic_0001>
module attributes {stable_mosaic.version = 11 : i64} {
  func.func @_qnet_kernel(%arg0: i32, %arg1: memref<8x32xf32, #tpu.memory_space<vmem>>, %arg2: memref<32x128xbf16, #tpu.memory_space<vmem>>, %arg3: memref<1x128xf32, #tpu.memory_space<vmem>>, %arg4: memref<128x128xf32, #tpu.memory_space<vmem>>, %arg5: memref<1x128xf32, #tpu.memory_space<vmem>>, %arg6: memref<8x128xf32, #tpu.memory_space<vmem>>) attributes {dimension_semantics = [#tpu.dimension_semantics<parallel>], iteration_bounds = array<i64: 1>, scalar_prefetch = 0 : i64, scratch_operands = 0 : i64, tpu.core_type = #tpu.core_type<tc>, window_params = [{transform_indices = @transform_0, window_bounds = array<i64: 8, 32>}, {pipeline_mode = #tpu.pipeline_mode<synchronous>, transform_indices = @transform_1, window_bounds = array<i64: 32, 128>}, {pipeline_mode = #tpu.pipeline_mode<synchronous>, transform_indices = @transform_2, window_bounds = array<i64: 1, 128>}, {pipeline_mode = #tpu.pipeline_mode<synchronous>, transform_indices = @transform_3, window_bounds = array<i64: 128, 128>}, {pipeline_mode = #tpu.pipeline_mode<synchronous>, transform_indices = @transform_4, window_bounds = array<i64: 1, 128>}, {transform_indices = @transform_5, window_bounds = array<i64: 8, 128>}]} {
    %c0 = arith.constant 0 : index
    %c0_0 = arith.constant 0 : index
    %0 = vector.load %arg1[%c0, %c0_0] : memref<8x32xf32, #tpu.memory_space<vmem>>, vector<8x32xf32>
    %1 = arith.truncf %0 : vector<8x32xf32> to vector<8x32xbf16>
    %c0_1 = arith.constant 0 : index
    %c0_2 = arith.constant 0 : index
    %2 = vector.load %arg2[%c0_1, %c0_2] : memref<32x128xbf16, #tpu.memory_space<vmem>>, vector<32x128xbf16>
    %cst = arith.constant dense<0.000000e+00> : vector<8x128xf32>
    %3 = tpu.matmul %1, %2, %cst {dimension_numbers = #tpu.dot_dimension_numbers<[1], [0], [0], [1], [0, 0, 1, 1], [], []>} : vector<8x32xbf16>, vector<32x128xbf16>, vector<8x128xf32> -> vector<8x128xf32>
    %c0_3 = arith.constant 0 : index
    %c0_4 = arith.constant 0 : index
    %4 = vector.load %arg3[%c0_3, %c0_4] : memref<1x128xf32, #tpu.memory_space<vmem>>, vector<1x128xf32>
    %5 = vector.broadcast %4 : vector<1x128xf32> to vector<8x128xf32>
    %6 = arith.addf %3, %5 : vector<8x128xf32>
    %cst_5 = arith.constant 0.000000e+00 : f32
    %7 = vector.broadcast %cst_5 : f32 to vector<8x128xf32>
    %8 = arith.maximumf %6, %7 : vector<8x128xf32>
    %c0_6 = arith.constant 0 : index
    %c0_7 = arith.constant 0 : index
    %9 = vector.load %arg4[%c0_6, %c0_7] : memref<128x128xf32, #tpu.memory_space<vmem>>, vector<128x128xf32>
    %cst_8 = arith.constant dense<0.000000e+00> : vector<8x128xf32>
    %10 = tpu.matmul %8, %9, %cst_8 {dimension_numbers = #tpu.dot_dimension_numbers<[1], [0], [0], [1], [0, 0, 1, 1], [], []>} : vector<8x128xf32>, vector<128x128xf32>, vector<8x128xf32> -> vector<8x128xf32>
    %c0_9 = arith.constant 0 : index
    %c0_10 = arith.constant 0 : index
    %11 = vector.load %arg5[%c0_9, %c0_10] : memref<1x128xf32, #tpu.memory_space<vmem>>, vector<1x128xf32>
    %12 = vector.broadcast %11 : vector<1x128xf32> to vector<8x128xf32>
    %13 = arith.addf %10, %12 : vector<8x128xf32>
    %c0_11 = arith.constant 0 : index
    %c0_12 = arith.constant 0 : index
    %14 = vector.load %arg6[%c0_11, %c0_12] : memref<8x128xf32, #tpu.memory_space<vmem>>, vector<8x128xf32>
    tpu.vector_store %arg6[%c0_11, %c0_12], %13 {strides = array<i32>} : memref<8x128xf32, #tpu.memory_space<vmem>>, vector<8x128xf32>,
    return
  }
  func.func @transform_0(%arg0: i32) -> (i32, i32) {
    %c0_i32 = arith.constant 0 : i32
    %c0_i32_0 = arith.constant 0 : i32
    return %arg0, %c0_i32 : i32, i32
  }
  func.func @transform_1(%arg0: i32) -> (i32, i32) {
    %c0_i32 = arith.constant 0 : i32
    %c0_i32_0 = arith.constant 0 : i32
    %c0_i32_1 = arith.constant 0 : i32
    return %c0_i32, %c0_i32_0 : i32, i32
  }
  func.func @transform_2(%arg0: i32) -> (i32, i32) {
    %c0_i32 = arith.constant 0 : i32
    %c0_i32_0 = arith.constant 0 : i32
    %c0_i32_1 = arith.constant 0 : i32
    return %c0_i32, %c0_i32_0 : i32, i32
  }
  func.func @transform_3(%arg0: i32) -> (i32, i32) {
    %c0_i32 = arith.constant 0 : i32
    %c0_i32_0 = arith.constant 0 : i32
    %c0_i32_1 = arith.constant 0 : i32
    return %c0_i32, %c0_i32_0 : i32, i32
  }
  func.func @transform_4(%arg0: i32) -> (i32, i32) {
    %c0_i32 = arith.constant 0 : i32
    %c0_i32_0 = arith.constant 0 : i32
    %c0_i32_1 = arith.constant 0 : i32
    return %c0_i32, %c0_i32_0 : i32, i32
  }
  func.func @transform_5(%arg0: i32) -> (i32, i32) {
    %c0_i32 = arith.constant 0 : i32
    %c0_i32_0 = arith.constant 0 : i32
    return %arg0, %c0_i32 : i32, i32
  }
}

</mosaic_0001>

<llo_original>
// kernel: qnetwork_forward.1
$region0: #{qnetwork_forward.1}
  #allocation0 [shape = 'u32[]', space=smem, size = 0x4, offset = 0x4, fixed_abs, tag = 'smem constant byte address 0x4 - core index']
  #allocation1 [shape = 'u32[72,128]{1,0:T(1,128)}', space=vmem, size = 0x9000, scoped, tag = 'internal scratch']
  %s0 = inlined_call_operand.vmem [shape: f32[2,32], index: 0, kind: input, shape index: {}]
  %s1 = inlined_call_operand.vmem [shape: bf16[32,128], index: 1, kind: input, shape index: {}]
  %s2 = inlined_call_operand.vmem [shape: f32[1,128], index: 2, kind: input, shape index: {}]
  %s3 = inlined_call_operand.vmem [shape: f32[128,128], index: 3, kind: input, shape index: {}]
  %s4 = inlined_call_operand.vmem [shape: f32[1,128], index: 4, kind: input, shape index: {}]
  %s5 = inlined_call_operand.hbm [shape: f32[2,128], index: 5, kind: output, shape index: {}]
  %s6 = sld [smem:[#allocation0]]
  $region30: #{qnetwork_forward.1} parent=0
    _
  %s8 = ssub.s32 1, %s6
  %s9 = scalar_select 0, %s8, %s6
  $region1: #{qnetwork_forward.1} parent=0
    #allocation2 [shape = 'u8[4096]{0}', space=vmem, size = 0x1000, scoped, tag = 'output window, operand 0, single buffered']
    #allocation3 [shape = 's32[1]{0}', space=sflag, size = 0x4, scoped, tag = 'scoped memory for qnetwork_forward.1']
    %10 = vsyncpa [#allocation3], 0
    // Predicated region
    $region2: #{qnetwork_forward.1} parent=1 // pred_check
      _
    $region3: #{qnetwork_forward.1} parent=1 // pred_check_branch
      %12 = sbr.rel (0) target = $region5
    $region4: #{qnetwork_forward.1} parent=1 // pred_region
      _
    $region5: #{qnetwork_forward.1} parent=1 // pred_fallthru
      _
    // Predicated region
    $region6: #{qnetwork_forward.1} parent=1 // pred_check
      _
    $region7: #{qnetwork_forward.1} parent=1 // pred_check_branch
      %14 = sbr.rel (0) target = $region9
    $region8: #{qnetwork_forward.1} parent=1 // pred_region
      _
    $region9: #{qnetwork_forward.1} parent=1 // pred_fallthru
      _
    // Predicated region
    $region10: #{qnetwork_forward.1} parent=1 // pred_check
      _
    $region11: #{qnetwork_forward.1} parent=1 // pred_check_branch
      %16 = sbr.rel (0) target = $region13
    $region12: #{qnetwork_forward.1} parent=1 // pred_region
      _
    $region13: #{qnetwork_forward.1} parent=1 // pred_fallthru
      _
    // Predicated region
    $region14: #{qnetwork_forward.1} parent=1 // pred_check
      _
    $region15: #{qnetwork_forward.1} parent=1 // pred_check_branch
      %18 = sbr.rel (0) target = $region17
    $region16: #{qnetwork_forward.1} parent=1 // pred_region
      _
    $region17: #{qnetwork_forward.1} parent=1 // pred_fallthru
      _
    // Predicated region
    $region18: #{qnetwork_forward.1} parent=1 // pred_check
      _
    $region19: #{qnetwork_forward.1} parent=1 // pred_check_branch
      %20 = sbr.rel (0) target = $region21
    $region20: #{qnetwork_forward.1} parent=1 // pred_region
      _
    $region21: #{qnetwork_forward.1} parent=1 // pred_fallthru
      _
    %v22 = vld [vmem:[%s0] sm:$0xff]
    %v23 = vpack.c.bf16 %v22, %v22
    %v24 = vld [vmem:[%s1] sm:$0xf]
    %v25 = vld [vmem:[%s1 + $0x4] sm:$0xf]
    %v26 = vld [vmem:[%s1 + $0x8] sm:$0xf]
    %v27 = vld [vmem:[%s1 + $0xc] sm:$0xf]
    %v28 = vld [vmem:[%s2] sm:$0x1]
    %v30 = vperm.slane %v28, 0
    %v36 = vunpack.c.l.b16 %v24
    %v37 = vunpack.c.l.b16 %v25
    %v38 = vunpack.c.l.b16 %v26
    %v39 = vunpack.c.l.b16 %v27
    %v40 = vpack.c.b16 %v37, %v36
    %v41 = vpack.c.b16 %v39, %v38
    %vm44 = vcmask 261120
    %v46 = vsel %vm44, %v23, 0
    %48 = vmatpush.bf16.msra.mxu0 0
    %49 = vmatpush.bf16.msra.mxu0 0
    %50 = vmatpush.bf16.msra.mxu0 0
    %51 = vmatpush.bf16.msra.mxu0 0
    %52 = vmatpush.bf16.msra.mxu0 0
    %53 = vmatpush.bf16.msra.mxu0 0
    %54 = vmatpush.bf16.msra.mxu0 %v41
    %55 = vmatpush.bf16.msra.mxu0 %v40
    %56 = vmatmul.bf16.gmra.mxu0 %v46
    %v57 = vpop.f32.mrf.mxu0
    %v58 = vadd.f32 %v30, %v57
    %v59 = vpop.f32.mrf.mxu0
    %60 = vdwg.mxu0
    %v61 = vmax.f32 %v58, 0.0
    %v62 = vld [vmem:[%s3] sm:$0xff]
    %v63 = vld [vmem:[%s3 + $0x8] sm:$0xff]
    %v64 = vld [vmem:[%s3 + $0x10] sm:$0xff]
    %v65 = vld [vmem:[%s3 + $0x18] sm:$0xff]
    %v66 = vld [vmem:[%s3 + $0x20] sm:$0xff]
    %v67 = vld [vmem:[%s3 + $0x28] sm:$0xff]
    %v68 = vld [vmem:[%s3 + $0x30] sm:$0xff]
    %v69 = vld [vmem:[%s3 + $0x38] sm:$0xff]
    %v70 = vld [vmem:[%s3 + $0x40] sm:$0xff]
    %v71 = vld [vmem:[%s3 + $0x48] sm:$0xff]
    %v72 = vld [vmem:[%s3 + $0x50] sm:$0xff]
    %v73 = vld [vmem:[%s3 + $0x58] sm:$0xff]
    %v74 = vld [vmem:[%s3 + $0x60] sm:$0xff]
    %v75 = vld [vmem:[%s3 + $0x68] sm:$0xff]
    %v76 = vld [vmem:[%s3 + $0x70] sm:$0xff]
    %v77 = vld [vmem:[%s3 + $0x78] sm:$0xff]
    %v78 = vld [vmem:[%s4] sm:$0x1]
    %v80 = vperm.slane %v78, 0
    %82 = vmatpush.msra.mxu0 %v77
    %83 = vmatpush.msra.mxu0 %v76
    %84 = vmatpush.msra.mxu0 %v75
    %85 = vmatpush.msra.mxu0 %v74
    %86 = vmatpush.msra.mxu0 %v73
    %87 = vmatpush.msra.mxu0 %v72
    %88 = vmatpush.msra.mxu0 %v71
    %89 = vmatpush.msra.mxu0 %v70
    %90 = vmatpush.msra.mxu0 %v69
    %91 = vmatpush.msra.mxu0 %v68
    %92 = vmatpush.msra.mxu0 %v67
    %93 = vmatpush.msra.mxu0 %v66
    %94 = vmatpush.msra.mxu0 %v65
    %95 = vmatpush.msra.mxu0 %v64
    %96 = vmatpush.msra.mxu0 %v63
    %97 = vmatpush.msra.mxu0 %v62
    %98 = vmatmul.f32.gmra.mxu0 %v61
    %v99 = vpop.f32.mrf.mxu0
    %v100 = vadd.f32 %v80, %v99
    %101 = vdwg.mxu0
    %102 = vst [vmem:[#allocation2] sm:$0xff] %v100
    // Predicated region
    $region22: #{qnetwork_forward.1} parent=1 // pred_check
      _
    $region23: #{qnetwork_forward.1} parent=1 // pred_check_branch
      %104 = sbr.rel (0) target = $region25
    $region24: #{qnetwork_forward.1} parent=1 // pred_region
      %106 = vsyncadd [#allocation3], 96
      %s107 = sshll.u32 [#allocation2], 4
      %s108 = int_to_ptr.vmem [resolvable:$true] %s107
      %s109 = sshll.u32 %s5, 4
      %s110 = int_to_ptr.hbm [resolvable:$true] %s109
      %115 = dma.vmem_to_hbm [thread:$0]  %s108, 32, %s110, [#allocation3], 32, 32, 2
    $region25: #{qnetwork_forward.1} parent=1 // pred_fallthru
      _
    // Predicated region
    $region26: #{qnetwork_forward.1} parent=1 // pred_check
      _
    $region27: #{qnetwork_forward.1} parent=1 // pred_check_branch
      %117 = sbr.rel (0) target = $region29
    $region28: #{qnetwork_forward.1} parent=1 // pred_region
      %119 = dma.done [#allocation3], 128
    $region29: #{qnetwork_forward.1} parent=1 // pred_fallthru
      _
    %120 = vsyncpa [#allocation3], 1

</llo_original>
